<compile_context>
chip_gen: v5e
topology: v5e:2x2
jax: 0.10.0
libtpu: 0.0.40
codegen_flags: <defaults>
</compile_context>

<pallas_src>
import jax
import jax.numpy as jnp
from jax.experimental import pallas as pl
from jax.experimental.pallas import tpu as pltpu


def _knn_partials_kernel(preds_ref, lab_ref, out_ref):
    """One N-tile: per-group CE sums + counts -> one (1, 8, 128) partial block."""
    x = preds_ref[...].astype(jnp.float32)      # [C, T]  classes x samples (lane-dense)
    tags = lab_ref[0:1, :]                      # [1, T] int32
    knn = lab_ref[1:2, :]                       # [1, T] int32

    # Per-sample cross entropy, reducing along the class (sublane) axis.
    m = jnp.max(x, axis=0, keepdims=True)                               # [1, T]
    lse = m + jnp.log(jnp.sum(jnp.exp(x - m), axis=0, keepdims=True))   # [1, T]
    cls = jax.lax.broadcasted_iota(jnp.int32, x.shape, 0)               # [C, T]
    picked = jnp.sum(jnp.where(cls == tags, x, 0.0), axis=0, keepdims=True)
    ce = lse - picked                                                   # [1, T]

    # Group-wise partial sums and counts (padded samples carry knn == -1).
    mask1 = (knn == 1).astype(jnp.float32)
    mask0 = (knn == 0).astype(jnp.float32)
    s1 = jnp.sum(ce * mask1)
    c1 = jnp.sum(mask1)
    s0 = jnp.sum(ce * mask0)
    c0 = jnp.sum(mask0)

    # Pack the four scalars into an (8,128)-aligned block: lanes 0..3 of sublane 0.
    sub = jax.lax.broadcasted_iota(jnp.int32, (8, 128), 0)
    lane = jax.lax.broadcasted_iota(jnp.int32, (8, 128), 1)
    flat = sub * 128 + lane
    blk = jnp.where(flat == 0, s1,
          jnp.where(flat == 1, c1,
          jnp.where(flat == 2, s0,
          jnp.where(flat == 3, c0, 0.0))))
    out_ref[...] = blk[None, :, :]


def _choose_tile_n(n, c, itemsize, budget_bytes=8 * 1024 * 1024, max_tile=4096):
    """Largest lane-tile (multiple of 128) whose double-buffered working set stays
    within `budget_bytes` (sized conservatively against v7x's 64 MiB VMEM)."""
    c_pad = ((max(c, 1) + 7) // 8) * 8                  # sublane padding of preds tile
    per_col = 2 * (c_pad * itemsize + 8 * 4)            # preds + fused labels, x2 buffers
    t = (budget_bytes // per_col) // 128 * 128
    t = max(128, min(max_tile, t))
    n_ceil = ((max(n, 1) + 127) // 128) * 128
    return min(t, n_ceil)


@jax.jit
def knn_loss(predictions, tags, knn_tags, uknn_lambda=1.0):
    """predictions: [N, C] float; tags: [N] int; knn_tags: [N] int in {0, 1}."""
    n, c = predictions.shape
    tile_n = _choose_tile_n(n, c, predictions.dtype.itemsize)
    num_tiles = (n + tile_n - 1) // tile_n
    n_pad = num_tiles * tile_n

    # Lane-dense repack: classes along sublanes, samples along lanes.
    preds_cm = jnp.pad(predictions, ((0, n_pad - n), (0, 0))).T          # [C, n_pad]
    tags_p = jnp.pad(tags.astype(jnp.int32), (0, n_pad - n))
    knn_p = jnp.pad(knn_tags.astype(jnp.int32), (0, n_pad - n),
                    constant_values=-1)                                  # pad -> no group
    labels = jnp.stack([tags_p, knn_p], axis=0)                          # [2, n_pad]

    partials = pl.pallas_call(
        _knn_partials_kernel,
        out_shape=jax.ShapeDtypeStruct((num_tiles, 8, 128), jnp.float32),
        grid=(num_tiles,),
        in_specs=[
            pl.BlockSpec((c, tile_n), lambda i: (0, i)),   # predictions tile
            pl.BlockSpec((2, tile_n), lambda i: (0, i)),   # fused tags/knn tile
        ],
        out_specs=pl.BlockSpec((1, 8, 128), lambda i: (i, 0, 0)),
        compiler_params=pltpu.CompilerParams(
            dimension_semantics=("parallel",),             # independent tiles -> megacore
            vmem_limit_bytes=32 * 1024 * 1024,
        ),
    )(preds_cm, labels)

    tot = jnp.sum(partials[:, 0, :4], axis=0)              # [sum1, cnt1, sum0, cnt0]
    s1, c1, s0, c0 = tot[0], tot[1], tot[2], tot[3]
    loss1 = jnp.where(c1 > 0, s1 / jnp.maximum(c1, 1.0), 0.0)
    loss0 = jnp.where(c0 > 0, s0 / jnp.maximum(c0, 1.0), 0.0)
    # Final scale outside the kernel -> lambda sweeps never trigger recompiles.
    return (loss1 - loss0) * jnp.asarray(uknn_lambda, jnp.float32)


def _reference_loss(preds, tags, knn, lam):
    logp = jax.nn.log_softmax(preds.astype(jnp.float32), axis=-1)
    ce = -jnp.take_along_axis(logp, tags[:, None].astype(jnp.int32), axis=-1)[:, 0]
    loss = jnp.float32(0.0)
    for g, sign in ((0, -1.0), (1, 1.0)):
        mask = (knn == g)
        cnt = mask.sum()
        grp = jnp.where(cnt > 0, (ce * mask).sum() / jnp.maximum(cnt, 1), 0.0)
        loss = loss + sign * grp
    return loss * lam


# TODO(synk): args.regression=True path (per-group MSELoss on regression_tags) is not
# implemented; only the CrossEntropyLoss branch is ported.
# TODO(synk): for very large class counts (C >> 2K) an online (flash-style) logsumexp
# tiled over C would be needed; current kernel keeps the full class extent per block.

if __name__ == "__main__":
    key = jax.random.PRNGKey(0)
    lam = 0.5  # deterministic "args.UKNN_lambda"

    # Case 1: tiny shape consistent with the module (N samples, C classes).
    k1, k2, k3, key = jax.random.split(key, 4)
    N, C = 8, 4
    preds = jax.random.normal(k1, (N, C), dtype=jnp.float32)
    tags = jax.random.randint(k2, (N,), 0, C, dtype=jnp.int32)
    knn = jax.random.randint(k3, (N,), 0, 2, dtype=jnp.int32)
    out = jax.block_until_ready(knn_loss(preds, tags, knn, lam))
    ref = _reference_loss(preds, tags, knn, lam)
    assert jnp.allclose(out, ref, atol=1e-4, rtol=1e-4), (out, ref)

    # Case 2: N not a multiple of 128 and odd class count (exercises padding path).
    k1, k2, k3, key = jax.random.split(key, 4)
    N, C = 300, 7
    preds = jax.random.normal(k1, (N, C), dtype=jnp.float32) * 3.0
    tags = jax.random.randint(k2, (N,), 0, C, dtype=jnp.int32)
    knn = jax.random.randint(k3, (N,), 0, 2, dtype=jnp.int32)
    out = jax.block_until_ready(knn_loss(preds, tags, knn, lam))
    ref = _reference_loss(preds, tags, knn, lam)
    assert jnp.allclose(out, ref, atol=1e-4, rtol=1e-4), (out, ref)

    # Case 3: empty group (all knn_tags == 1) exercises the len(idx) > 0 guard.
    knn_all1 = jnp.ones((N,), jnp.int32)
    out = jax.block_until_ready(knn_loss(preds, tags, knn_all1, lam))
    ref = _reference_loss(preds, tags, knn_all1, lam)
    assert jnp.allclose(out, ref, atol=1e-4, rtol=1e-4), (out, ref)

    print("KERNEL_OK")
</pallas_src>

<mosaic_0001>
module attributes {stable_mosaic.version = 11 : i64} {
  func.func @_knn_partials_kernel(%arg0: i32, %arg1: memref<4x128xf32, #tpu.memory_space<vmem>>, %arg2: memref<2x128xi32, #tpu.memory_space<vmem>>, %arg3: memref<1x8x128xf32, #tpu.memory_space<vmem>>) attributes {dimension_semantics = [#tpu.dimension_semantics<parallel>], iteration_bounds = array<i64: 1>, scalar_prefetch = 0 : i64, scratch_operands = 0 : i64, tpu.core_type = #tpu.core_type<tc>, window_params = [{transform_indices = @transform_0, window_bounds = array<i64: 4, 128>}, {transform_indices = @transform_1, window_bounds = array<i64: 2, 128>}, {transform_indices = @transform_2, window_bounds = array<i64: 1, 8, 128>}]} {
    %c0 = arith.constant 0 : index
    %c0_0 = arith.constant 0 : index
    %0 = vector.load %arg1[%c0, %c0_0] : memref<4x128xf32, #tpu.memory_space<vmem>>, vector<4x128xf32>
    %c0_1 = arith.constant 0 : index
    %c0_2 = arith.constant 0 : index
    %1 = vector.load %arg2[%c0_1, %c0_2] : memref<2x128xi32, #tpu.memory_space<vmem>>, vector<1x128xi32>
    %c1 = arith.constant 1 : index
    %c0_3 = arith.constant 0 : index
    %2 = vector.load %arg2[%c1, %c0_3] : memref<2x128xi32, #tpu.memory_space<vmem>>, vector<1x128xi32>
    %cst = arith.constant dense<0xFF800000> : vector<128xf32>
    %3 = vector.multi_reduction <maximumf>, %0, %cst [0] : vector<4x128xf32> to vector<128xf32>
    %4 = vector.shape_cast %3 : vector<128xf32> to vector<1x128xf32>
    %5 = vector.broadcast %4 : vector<1x128xf32> to vector<4x128xf32>
    %6 = arith.subf %0, %5 : vector<4x128xf32>
    %7 = math.exp %6 : vector<4x128xf32>
    %cst_4 = arith.constant dense<0.000000e+00> : vector<128xf32>
    %8 = vector.multi_reduction <add>, %7, %cst_4 [0] : vector<4x128xf32> to vector<128xf32>
    %9 = vector.shape_cast %8 : vector<128xf32> to vector<1x128xf32>
    %10 = math.log %9 : vector<1x128xf32>
    %11 = arith.addf %4, %10 : vector<1x128xf32>
    %12 = tpu.iota {dimensions = array<i32: 0>} : vector<4x128xi32>
    %13 = vector.broadcast %1 : vector<1x128xi32> to vector<4x128xi32>
    %14 = arith.cmpi eq, %12, %13 : vector<4x128xi32>
    %cst_5 = arith.constant 0.000000e+00 : f32
    %15 = vector.broadcast %cst_5 : f32 to vector<4x128xf32>
    %16 = arith.select %14, %0, %15 : vector<4x128xi1>, vector<4x128xf32>
    %cst_6 = arith.constant dense<0.000000e+00> : vector<128xf32>
    %17 = vector.multi_reduction <add>, %16, %cst_6 [0] : vector<4x128xf32> to vector<128xf32>
    %18 = vector.shape_cast %17 : vector<128xf32> to vector<1x128xf32>
    %19 = arith.subf %11, %18 : vector<1x128xf32>
    %c1_i32 = arith.constant 1 : i32
    %20 = vector.broadcast %c1_i32 : i32 to vector<1x128xi32>
    %21 = arith.cmpi eq, %2, %20 : vector<1x128xi32>
    %22 = arith.extui %21 : vector<1x128xi1> to vector<1x128xi32>
    %23 = arith.sitofp %22 : vector<1x128xi32> to vector<1x128xf32>
    %c0_i32 = arith.constant 0 : i32
    %24 = vector.broadcast %c0_i32 : i32 to vector<1x128xi32>
    %25 = arith.cmpi eq, %2, %24 : vector<1x128xi32>
    %26 = arith.extui %25 : vector<1x128xi1> to vector<1x128xi32>
    %27 = arith.sitofp %26 : vector<1x128xi32> to vector<1x128xf32>
    %28 = arith.mulf %19, %23 : vector<1x128xf32>
    %29 = vector.shape_cast %28 : vector<1x128xf32> to vector<1x1x128xf32>
    %cst_7 = arith.constant dense<0.000000e+00> : vector<1xf32>
    %30 = vector.multi_reduction <add>, %29, %cst_7 [1, 2] : vector<1x1x128xf32> to vector<1xf32>
    %31 = vector.shape_cast %30 : vector<1xf32> to vector<1x1x1xf32>
    %32 = vector.extract %31[0, 0, 0] : f32 from vector<1x1x1xf32>
    %33 = vector.shape_cast %23 : vector<1x128xf32> to vector<1x1x128xf32>
    %cst_8 = arith.constant dense<0.000000e+00> : vector<1xf32>
    %34 = vector.multi_reduction <add>, %33, %cst_8 [1, 2] : vector<1x1x128xf32> to vector<1xf32>
    %35 = vector.shape_cast %34 : vector<1xf32> to vector<1x1x1xf32>
    %36 = vector.extract %35[0, 0, 0] : f32 from vector<1x1x1xf32>
    %37 = arith.mulf %19, %27 : vector<1x128xf32>
    %38 = vector.shape_cast %37 : vector<1x128xf32> to vector<1x1x128xf32>
    %cst_9 = arith.constant dense<0.000000e+00> : vector<1xf32>
    %39 = vector.multi_reduction <add>, %38, %cst_9 [1, 2] : vector<1x1x128xf32> to vector<1xf32>
    %40 = vector.shape_cast %39 : vector<1xf32> to vector<1x1x1xf32>
    %41 = vector.extract %40[0, 0, 0] : f32 from vector<1x1x1xf32>
    %42 = vector.shape_cast %27 : vector<1x128xf32> to vector<1x1x128xf32>
    %cst_10 = arith.constant dense<0.000000e+00> : vector<1xf32>
    %43 = vector.multi_reduction <add>, %42, %cst_10 [1, 2] : vector<1x1x128xf32> to vector<1xf32>
    %44 = vector.shape_cast %43 : vector<1xf32> to vector<1x1x1xf32>
    %45 = vector.extract %44[0, 0, 0] : f32 from vector<1x1x1xf32>
    %46 = tpu.iota {dimensions = array<i32: 0>} : vector<8x128xi32>
    %47 = tpu.iota {dimensions = array<i32: 1>} : vector<8x128xi32>
    %c128_i32 = arith.constant 128 : i32
    %48 = vector.broadcast %c128_i32 : i32 to vector<8x128xi32>
    %49 = arith.muli %46, %48 : vector<8x128xi32>
    %50 = arith.addi %49, %47 : vector<8x128xi32>
    %c0_i32_11 = arith.constant 0 : i32
    %51 = vector.broadcast %c0_i32_11 : i32 to vector<8x128xi32>
    %52 = arith.cmpi eq, %50, %51 : vector<8x128xi32>
    %c1_i32_12 = arith.constant 1 : i32
    %53 = vector.broadcast %c1_i32_12 : i32 to vector<8x128xi32>
    %54 = arith.cmpi eq, %50, %53 : vector<8x128xi32>
    %c2_i32 = arith.constant 2 : i32
    %55 = vector.broadcast %c2_i32 : i32 to vector<8x128xi32>
    %56 = arith.cmpi eq, %50, %55 : vector<8x128xi32>
    %c3_i32 = arith.constant 3 : i32
    %57 = vector.broadcast %c3_i32 : i32 to vector<8x128xi32>
    %58 = arith.cmpi eq, %50, %57 : vector<8x128xi32>
    %cst_13 = arith.constant 0.000000e+00 : f32
    %59 = vector.broadcast %45 : f32 to vector<8x128xf32>
    %60 = vector.broadcast %cst_13 : f32 to vector<8x128xf32>
    %61 = arith.select %58, %59, %60 : vector<8x128xi1>, vector<8x128xf32>
    %62 = vector.broadcast %41 : f32 to vector<8x128xf32>
    %63 = arith.select %56, %62, %61 : vector<8x128xi1>, vector<8x128xf32>
    %64 = vector.broadcast %36 : f32 to vector<8x128xf32>
    %65 = arith.select %54, %64, %63 : vector<8x128xi1>, vector<8x128xf32>
    %66 = vector.broadcast %32 : f32 to vector<8x128xf32>
    %67 = arith.select %52, %66, %65 : vector<8x128xi1>, vector<8x128xf32>
    %68 = vector.shape_cast %67 : vector<8x128xf32> to vector<1x8x128xf32>
    %c0_14 = arith.constant 0 : index
    %c0_15 = arith.constant 0 : index
    %c0_16 = arith.constant 0 : index
    %69 = vector.load %arg3[%c0_14, %c0_15, %c0_16] : memref<1x8x128xf32, #tpu.memory_space<vmem>>, vector<1x8x128xf32>
    tpu.vector_store %arg3[%c0_14, %c0_15, %c0_16], %68 {strides = array<i32>} : memref<1x8x128xf32, #tpu.memory_space<vmem>>, vector<1x8x128xf32>,
    return
  }
  func.func @transform_0(%arg0: i32) -> (i32, i32) {
    %c0_i32 = arith.constant 0 : i32
    %c0_i32_0 = arith.constant 0 : i32
    return %c0_i32, %arg0 : i32, i32
  }
  func.func @transform_1(%arg0: i32) -> (i32, i32) {
    %c0_i32 = arith.constant 0 : i32
    %c0_i32_0 = arith.constant 0 : i32
    return %c0_i32, %arg0 : i32, i32
  }
  func.func @transform_2(%arg0: i32) -> (i32, i32, i32) {
    %c0_i32 = arith.constant 0 : i32
    %c0_i32_0 = arith.constant 0 : i32
    %c0_i32_1 = arith.constant 0 : i32
    return %arg0, %c0_i32, %c0_i32_0 : i32, i32, i32
  }
}

</mosaic_0001>

<llo_original>
// kernel: knn_loss.1
$region0: #{knn_loss.1}
  #allocation0 [shape = 'u32[]', space=smem, size = 0x4, offset = 0x4, fixed_abs, tag = 'smem constant byte address 0x4 - core index']
  #allocation1 [shape = 'u32[72,128]{1,0:T(1,128)}', space=vmem, size = 0x9000, scoped, tag = 'internal scratch']
  %s0 = inlined_call_operand.vmem [shape: f32[4,128], index: 0, kind: input, shape index: {}]
  %s1 = inlined_call_operand.vmem [shape: s32[2,128], index: 1, kind: input, shape index: {}]
  %s2 = inlined_call_operand.vmem [shape: f32[1,8,128], index: 2, kind: output, shape index: {}]
  %s3 = sld [smem:[#allocation0]]
  $region18: #{knn_loss.1} parent=0
    _
  %s5 = ssub.s32 1, %s3
  %s6 = scalar_select 0, %s5, %s3
  // Predicated region
  $region2: #{knn_loss.1} parent=0 // pred_check
    _
  $region3: #{knn_loss.1} parent=0 // pred_check_branch
    %8 = sbr.rel (0) target = $region5
  $region4: #{knn_loss.1} parent=0 // pred_region
    _
  $region5: #{knn_loss.1} parent=0 // pred_fallthru
    _
  // Predicated region
  $region6: #{knn_loss.1} parent=0 // pred_check
    _
  $region7: #{knn_loss.1} parent=0 // pred_check_branch
    %10 = sbr.rel (0) target = $region9
  $region8: #{knn_loss.1} parent=0 // pred_region
    _
  $region9: #{knn_loss.1} parent=0 // pred_fallthru
    _
  %v11 = vld [vmem:[%s0] sm:$0xf]
  %v12 = vld [vmem:[%s1] sm:$0x1]
  %v13 = vld [vmem:[%s1 + $0x1] sm:$0x1]
  %vm14 = vcmask 1043456
  %v15 = vsel %vm14, %v11, -inf
  %v16 = vrot.slane %v15, 4
  %v17 = vmax.f32 %v15, %v16
  %v18 = vrot.slane %v17, 2
  %v19 = vmax.f32 %v17, %v18
  %v20 = vrot.slane %v19, 1
  %v21 = vmax.f32 %v19, %v20
  %v22 = vsub.f32 %v11, %v21
  %v23 = vmul.f32 %v22, 1.442695
  %v24 = vpow.pop %v23
  %v25 = vsel %vm14, %v24, 0.0
  %v26 = vrot.slane %v25, 4
  %v27 = vadd.f32 %v25, %v26
  %v28 = vrot.slane %v27, 2
  %v29 = vadd.f32 %v27, %v28
  %v30 = vrot.slane %v29, 1
  %v31 = vadd.f32 %v29, %v30
  %v32 = vlog2.pop %v31
  %v33 = vmul.f32 %v32, 0.6931472
  %v34 = vadd.f32 %v21, %v33
  %v35 = vlaneseq
  %v36 = vshrl.u32 %v35, 7
  %v37 = vperm.slane %v12, 0
  %vm38 = vcmp.eq.s32.totalorder %v36, %v37
  %v39 = vsel %vm38, %v11, 0.0
  %v40 = vsel %vm14, %v39, 0.0
  %v41 = vrot.slane %v40, 4
  %v42 = vadd.f32 %v40, %v41
  %v43 = vrot.slane %v42, 2
  %v44 = vadd.f32 %v42, %v43
  %v45 = vrot.slane %v44, 1
  %v46 = vadd.f32 %v44, %v45
  %v47 = vsub.f32 %v34, %v46
  %vm48 = vcmp.eq.s32.totalorder %v13, 1
  %v49 = vsel %vm48, 1, 0
  %v50 = vcvt.s32.f32 %v49
  %vm51 = vcmp.eq.s32.totalorder %v13, 0
  %v52 = vsel %vm51, 1, 0
  %v53 = vcvt.s32.f32 %v52
  %v54 = vmul.f32 %v47, %v50
  %vm55 = vcmask 1040384
  %v56 = vsel %vm55, %v54, 0.0
  %57 = vadd.xlane.f32.xlu0 %v56
  %v58 = vpop.xlane.xlu0 %57
  %v59 = vrot.slane %v58, 4
  %v60 = vadd.f32 %v58, %v59
  %v61 = vrot.slane %v60, 2
  %v62 = vadd.f32 %v60, %v61
  %v63 = vrot.slane %v62, 1
  %v64 = vadd.f32 %v62, %v63
  %s65 = vtos %v64
  %v66 = vsel %vm55, %v50, 0.0
  %67 = vadd.xlane.f32.xlu0 %v66
  %v68 = vpop.xlane.xlu0 %67
  %v69 = vrot.slane %v68, 4
  %v70 = vadd.f32 %v68, %v69
  %v71 = vrot.slane %v70, 2
  %v72 = vadd.f32 %v70, %v71
  %v73 = vrot.slane %v72, 1
  %v74 = vadd.f32 %v72, %v73
  %s75 = vtos %v74
  %v76 = vmul.f32 %v47, %v53
  %v77 = vsel %vm55, %v76, 0.0
  %78 = vadd.xlane.f32.xlu0 %v77
  %v79 = vpop.xlane.xlu0 %78
  %v80 = vrot.slane %v79, 4
  %v81 = vadd.f32 %v79, %v80
  %v82 = vrot.slane %v81, 2
  %v83 = vadd.f32 %v81, %v82
  %v84 = vrot.slane %v83, 1
  %v85 = vadd.f32 %v83, %v84
  %s86 = vtos %v85
  %v87 = vsel %vm55, %v53, 0.0
  %88 = vadd.xlane.f32.xlu0 %v87
  %v89 = vpop.xlane.xlu0 %88
  %v90 = vrot.slane %v89, 4
  %v91 = vadd.f32 %v89, %v90
  %v92 = vrot.slane %v91, 2
  %v93 = vadd.f32 %v91, %v92
  %v94 = vrot.slane %v93, 1
  %v95 = vadd.f32 %v93, %v94
  %s96 = vtos %v95
  %v97 = vlaneseq
  %v98 = vand.u32 %v97, 127
  %v99 = vmul.u32 %v36, 128
  %v100 = vadd.s32 %v99, %v98
  %vm101 = vcmp.eq.s32.totalorder %v100, 0
  %vm102 = vcmp.eq.s32.totalorder %v100, 1
  %vm103 = vcmp.eq.s32.totalorder %v100, 2
  %vm104 = vcmp.eq.s32.totalorder %v100, 3
  %v105 = vstv %s96
  %v106 = vsel %vm104, %v105, 0.0
  %v107 = vstv %s86
  %v108 = vsel %vm103, %v107, %v106
  %v109 = vstv %s75
  %v110 = vsel %vm102, %v109, %v108
  %v111 = vstv %s65
  %v112 = vsel %vm101, %v111, %v110
  %113 = vst [vmem:[%s2] sm:$0xff] %v112
  // Predicated region
  $region10: #{knn_loss.1} parent=0 // pred_check
    _
  $region11: #{knn_loss.1} parent=0 // pred_check_branch
    %115 = sbr.rel (0) target = $region13
  $region12: #{knn_loss.1} parent=0 // pred_region
    _
  $region13: #{knn_loss.1} parent=0 // pred_fallthru
    _
  // Predicated region
  $region14: #{knn_loss.1} parent=0 // pred_check
    _
  $region15: #{knn_loss.1} parent=0 // pred_check_branch
    %117 = sbr.rel (0) target = $region17
  $region16: #{knn_loss.1} parent=0 // pred_region
    _
  $region17: #{knn_loss.1} parent=0 // pred_fallthru
    _

</llo_original>
